<compile_context>
chip_gen: v5e
topology: v5e:2x2
jax: 0.10.0
libtpu: 0.0.40
codegen_flags: <defaults>
</compile_context>

<pallas_src>
import jax
import jax.numpy as jnp
from jax.experimental import pallas as pl
from jax.experimental.pallas import tpu as pltpu


def _round_up(x, m):
    return ((x + m - 1) // m) * m


def _lane_pad(n):
    return _round_up(n, 128)


def _vmem_capacity_bytes():
    """Physical VMEM per TensorCore; conservative (v7x) fallback if unknown."""
    try:
        cap = getattr(pltpu.get_tpu_info(), "vmem_capacity_bytes", None)
        if cap:
            return int(cap)
    except Exception:
        pass
    return 64 << 20


def _fast_sigmoid(z):
    # sigmoid(z) == 0.5*tanh(z/2) + 0.5 : one EUP op per element (no exp+divide).
    return 0.5 * jnp.tanh(0.5 * z) + 0.5


def _make_kernel(mm_dtype):
    def ann_kernel(x_ref, w1_ref, b1_ref, w2_ref, b2_ref, o_ref):
        # Layer 1 on the MXU.  x is read from HBM as f32; the cast to the MXU
        # dtype is an in-kernel VPU op (no extra HBM pass in the wrapper).
        x = x_ref[...].astype(mm_dtype)
        h = jnp.dot(x, w1_ref[...], preferred_element_type=jnp.float32)
        h = _fast_sigmoid(h + b1_ref[...])                    # (TBp, P*H) f32

        # Layer 2 (tiny): block-diagonal W2 folds each packed group of P
        # samples back to one output per sample -> (TBp, P).
        y = jnp.dot(h, w2_ref[...], preferred_element_type=jnp.float32)
        b2 = b2_ref[0, 0]                                     # SMEM scalar read
        o_ref[...] = _fast_sigmoid(y + b2).astype(o_ref.dtype)

    return ann_kernel


def ann_forward(x, w1, b1, w2, b2, *, use_bf16=True, max_tb=32768):
    """Forward pass of ANNModel.

    x: (B, D); w1: (D, H); b1: (H,)/(1,H); w2: (H, 1); b2: scalar-like.
    Returns (B, 1) float32.
    """
    B, D = x.shape
    H = w1.shape[1]

    # ---- Lane-packing factor -------------------------------------------------
    # Pack P samples per row (row-major reshape = zero copy) so the lane dim of
    # x is P*D (<=128) and of h is P*H.  P must divide B so no padding pass is
    # ever needed over x.
    P = 1
    for p in range(min(B, max(1, 128 // D)), 0, -1):
        if B % p == 0:
            P = p
            break
    # TODO(synk): for awkward (e.g. prime) B this falls back to small P; a
    # split-off <=8-row tail call would restore full packing.
    Wp, PH, Rp = P * D, P * H, B // P

    # ---- Host-side operand prep (tiny, resident weights only) -----------------
    mm_dtype = jnp.bfloat16 if use_bf16 else jnp.float32
    w1f = jnp.asarray(w1, jnp.float32).reshape(D, H)
    b1f = jnp.asarray(b1, jnp.float32).reshape(1, H)
    w2f = jnp.asarray(w2, jnp.float32).reshape(H, 1)
    eye = jnp.eye(P, dtype=jnp.float32)
    w1_blk = jnp.kron(eye, w1f).astype(mm_dtype)    # (Wp, PH) block-diagonal
    b1_blk = jnp.tile(b1f, (1, P))                  # (1, PH)
    w2_blk = jnp.kron(eye, w2f)                     # (PH, P) block-diagonal, f32
    b2_in = jnp.asarray(b2, jnp.float32).reshape(1, 1)
    x_packed = x.astype(jnp.float32).reshape(Rp, Wp)    # zero-copy reshape, f32

    # ---- Batch-tile sizing: padded-lane VMEM math + per-generation budget ----
    bytes_per_prow = (
        2 * _lane_pad(Wp) * 4                       # double-buffered f32 x tile
        + 2 * _lane_pad(P) * 4                      # double-buffered f32 out tile
        + 4 * _lane_pad(PH) * 4                     # h / activation f32 temporaries
        + _lane_pad(Wp) * 2                         # in-kernel bf16 copy of x
    )
    resident_bytes = 2 * (
        _round_up(Wp, 8) * _lane_pad(PH) * (2 if use_bf16 else 4)   # W1 block
        + 8 * _lane_pad(PH) * 4                                     # b1 row
        + _round_up(PH, 8) * _lane_pad(P) * 4                       # W2 block
    )
    vmem_cap = _vmem_capacity_bytes()
    vmem_budget = int(min(0.5 * vmem_cap, 48 << 20))   # 48 MiB v5e/v6e, 32 MiB v7x
    vmem_limit = int(min(0.75 * vmem_cap, 96 << 20))   # raise v5e's 16 MiB default

    tbp_vmem = max(8, ((vmem_budget - resident_bytes) // bytes_per_prow) // 8 * 8)
    tbp_user = max(8, (max_tb // P) // 8 * 8)
    tbp_cap = min(tbp_vmem, tbp_user)
    if Rp >= 16:
        # Keep >= 2 grid steps so v7x's two TensorCores both get work.
        tbp_cap = min(tbp_cap, _round_up(pl.cdiv(Rp, 2), 8))
    if Rp <= 8:
        TBp = Rp                                    # single block == whole array
    else:
        TBp = max(8, min(tbp_cap, (Rp // 8) * 8))   # multiple of 8 sublanes
    num_tiles = pl.cdiv(Rp, TBp)                    # ragged last tile is clipped

    out = pl.pallas_call(
        _make_kernel(mm_dtype),
        out_shape=jax.ShapeDtypeStruct((Rp, P), jnp.float32),
        grid=(num_tiles,),
        in_specs=[
            pl.BlockSpec((TBp, Wp), lambda i: (i, 0)),        # packed x (streamed)
            pl.BlockSpec((Wp, PH), lambda i: (0, 0)),         # W1 block (resident)
            pl.BlockSpec((1, PH), lambda i: (0, 0)),          # b1 row  (resident)
            pl.BlockSpec((PH, P), lambda i: (0, 0)),          # W2 block (resident)
            pl.BlockSpec(memory_space=pltpu.MemorySpace.SMEM),    # b2 scalar
        ],
        out_specs=pl.BlockSpec((TBp, P), lambda i: (i, 0)),
        compiler_params=pltpu.CompilerParams(
            dimension_semantics=("parallel",),
            vmem_limit_bytes=vmem_limit,
        ),
    )(x_packed, w1_blk, b1_blk, w2_blk, b2_in)

    # (Rp, P) row-major == batch order; zero-copy reshape back to (B, 1).
    return out.reshape(B, 1)


def init_params(key, input_dim, hidden_dim):
    """Deterministic init mimicking nn.Linear's U(-1/sqrt(fan_in), 1/sqrt(fan_in))."""
    k1, k2, k3, k4 = jax.random.split(key, 4)
    bound1 = 1.0 / jnp.sqrt(input_dim)
    bound2 = 1.0 / jnp.sqrt(hidden_dim)
    # Stored already transposed: (in_features, out_features)
    w1 = jax.random.uniform(k1, (input_dim, hidden_dim), jnp.float32, -bound1, bound1)
    b1 = jax.random.uniform(k2, (1, hidden_dim), jnp.float32, -bound1, bound1)
    w2 = jax.random.uniform(k3, (hidden_dim, 1), jnp.float32, -bound2, bound2)
    b2 = jax.random.uniform(k4, (1, 1), jnp.float32, -bound2, bound2)
    return w1, b1, w2, b2


if __name__ == "__main__":
    batch = 8
    input_dim = 16   # stand-in for X_train.shape[1]
    hidden_dim = 32

    key = jax.random.PRNGKey(0)
    kx, kp, kx2 = jax.random.split(key, 3)
    x = jax.random.normal(kx, (batch, input_dim), jnp.float32)
    w1, b1, w2, b2 = init_params(kp, input_dim, hidden_dim)

    def ref_fn(xx):
        return jax.nn.sigmoid(jax.nn.sigmoid(xx @ w1 + b1) @ w2 + b2)

    # Exact (f32-operand) path: tight tolerance vs reference.
    out_f32 = ann_forward(x, w1, b1, w2, b2, use_bf16=False)
    jax.block_until_ready(out_f32)
    assert out_f32.shape == (batch, 1)
    assert jnp.allclose(out_f32, ref_fn(x), atol=1e-4), "f32 mismatch vs reference"

    # bf16 fast path: loosened tolerance (bf16 MXU operands, f32 accumulate).
    out_bf16 = ann_forward(x, w1, b1, w2, b2, use_bf16=True)
    jax.block_until_ready(out_bf16)
    assert jnp.allclose(out_bf16, ref_fn(x), atol=2e-2), "bf16 mismatch vs reference"

    # Larger batch: exercises partial lane packing (P=6), the >=2-tile megacore
    # split, and the ragged last row-tile (boundary-clipped, no jnp.pad pass).
    batch2 = 300
    x2 = jax.random.normal(kx2, (batch2, input_dim), jnp.float32)
    out2 = ann_forward(x2, w1, b1, w2, b2, use_bf16=True)
    jax.block_until_ready(out2)
    assert out2.shape == (batch2, 1)
    assert jnp.allclose(out2, ref_fn(x2), atol=2e-2), "multi-tile mismatch vs reference"

    # Force many small tiles (ragged last tile of 2 packed rows) via max_tb.
    out3 = ann_forward(x2, w1, b1, w2, b2, use_bf16=True, max_tb=64)
    jax.block_until_ready(out3)
    assert jnp.allclose(out3, ref_fn(x2), atol=2e-2), "small-tile mismatch vs reference"

    print("KERNEL_OK")
</pallas_src>

<mosaic_0001>
module attributes {stable_mosaic.version = 11 : i64} {
  func.func @ann_kernel(%arg0: i32, %arg1: memref<1x128xf32, #tpu.memory_space<vmem>>, %arg2: memref<128x256xf32, #tpu.memory_space<vmem>>, %arg3: memref<1x256xf32, #tpu.memory_space<vmem>>, %arg4: memref<256x8xf32, #tpu.memory_space<vmem>>, %arg5: memref<1x1xf32, #tpu.memory_space<smem>>, %arg6: memref<1x8xf32, #tpu.memory_space<vmem>>) attributes {dimension_semantics = [#tpu.dimension_semantics<parallel>], iteration_bounds = array<i64: 1>, scalar_prefetch = 0 : i64, scratch_operands = 0 : i64, tpu.core_type = #tpu.core_type<tc>, window_params = [{transform_indices = @transform_0, window_bounds = array<i64: 1, 128>}, {pipeline_mode = #tpu.pipeline_mode<synchronous>, transform_indices = @transform_1, window_bounds = array<i64: 128, 256>}, {pipeline_mode = #tpu.pipeline_mode<synchronous>, transform_indices = @transform_2, window_bounds = array<i64: 1, 256>}, {pipeline_mode = #tpu.pipeline_mode<synchronous>, transform_indices = @transform_3, window_bounds = array<i64: 256, 8>}, {transform_indices = @transform_4, window_bounds = array<i64: 1, 1>}, {transform_indices = @transform_5, window_bounds = array<i64: 1, 8>}]} {
    %c0 = arith.constant 0 : index
    %c0_0 = arith.constant 0 : index
    %0 = vector.load %arg1[%c0, %c0_0] : memref<1x128xf32, #tpu.memory_space<vmem>>, vector<1x128xf32>
    %c0_1 = arith.constant 0 : index
    %c0_2 = arith.constant 0 : index
    %1 = vector.load %arg2[%c0_1, %c0_2] : memref<128x256xf32, #tpu.memory_space<vmem>>, vector<128x256xf32>
    %cst = arith.constant dense<0.000000e+00> : vector<1x256xf32>
    %2 = tpu.matmul %0, %1, %cst {dimension_numbers = #tpu.dot_dimension_numbers<[1], [0], [0], [1], [0, 0, 1, 1], [], []>} : vector<1x128xf32>, vector<128x256xf32>, vector<1x256xf32> -> vector<1x256xf32>
    %c0_3 = arith.constant 0 : index
    %c0_4 = arith.constant 0 : index
    %3 = vector.load %arg3[%c0_3, %c0_4] : memref<1x256xf32, #tpu.memory_space<vmem>>, vector<1x256xf32>
    %4 = arith.addf %2, %3 : vector<1x256xf32>
    %cst_5 = arith.constant 5.000000e-01 : f32
    %5 = vector.broadcast %cst_5 : f32 to vector<1x256xf32>
    %6 = arith.mulf %5, %4 : vector<1x256xf32>
    %7 = math.tanh %6 : vector<1x256xf32>
    %cst_6 = arith.constant 5.000000e-01 : f32
    %8 = vector.broadcast %cst_6 : f32 to vector<1x256xf32>
    %9 = arith.mulf %8, %7 : vector<1x256xf32>
    %cst_7 = arith.constant 5.000000e-01 : f32
    %10 = vector.broadcast %cst_7 : f32 to vector<1x256xf32>
    %11 = arith.addf %9, %10 : vector<1x256xf32>
    %c0_8 = arith.constant 0 : index
    %c0_9 = arith.constant 0 : index
    %12 = vector.load %arg4[%c0_8, %c0_9] : memref<256x8xf32, #tpu.memory_space<vmem>>, vector<256x8xf32>
    %cst_10 = arith.constant dense<0.000000e+00> : vector<1x8xf32>
    %13 = tpu.matmul %11, %12, %cst_10 {dimension_numbers = #tpu.dot_dimension_numbers<[1], [0], [0], [1], [0, 0, 1, 1], [], []>} : vector<1x256xf32>, vector<256x8xf32>, vector<1x8xf32> -> vector<1x8xf32>
    %c0_11 = arith.constant 0 : index
    %c0_12 = arith.constant 0 : index
    %14 = memref.load %arg5[%c0_11, %c0_12] : memref<1x1xf32, #tpu.memory_space<smem>>
    %15 = vector.broadcast %14 : f32 to vector<1x8xf32>
    %16 = arith.addf %13, %15 : vector<1x8xf32>
    %cst_13 = arith.constant 5.000000e-01 : f32
    %17 = vector.broadcast %cst_13 : f32 to vector<1x8xf32>
    %18 = arith.mulf %17, %16 : vector<1x8xf32>
    %19 = math.tanh %18 : vector<1x8xf32>
    %cst_14 = arith.constant 5.000000e-01 : f32
    %20 = vector.broadcast %cst_14 : f32 to vector<1x8xf32>
    %21 = arith.mulf %20, %19 : vector<1x8xf32>
    %cst_15 = arith.constant 5.000000e-01 : f32
    %22 = vector.broadcast %cst_15 : f32 to vector<1x8xf32>
    %23 = arith.addf %21, %22 : vector<1x8xf32>
    %c0_16 = arith.constant 0 : index
    %c0_17 = arith.constant 0 : index
    %24 = vector.load %arg6[%c0_16, %c0_17] : memref<1x8xf32, #tpu.memory_space<vmem>>, vector<1x8xf32>
    tpu.vector_store %arg6[%c0_16, %c0_17], %23 {strides = array<i32>} : memref<1x8xf32, #tpu.memory_space<vmem>>, vector<1x8xf32>,
    return
  }
  func.func @transform_0(%arg0: i32) -> (i32, i32) {
    %c0_i32 = arith.constant 0 : i32
    %c0_i32_0 = arith.constant 0 : i32
    return %arg0, %c0_i32 : i32, i32
  }
  func.func @transform_1(%arg0: i32) -> (i32, i32) {
    %c0_i32 = arith.constant 0 : i32
    %c0_i32_0 = arith.constant 0 : i32
    %c0_i32_1 = arith.constant 0 : i32
    return %c0_i32, %c0_i32_0 : i32, i32
  }
  func.func @transform_2(%arg0: i32) -> (i32, i32) {
    %c0_i32 = arith.constant 0 : i32
    %c0_i32_0 = arith.constant 0 : i32
    %c0_i32_1 = arith.constant 0 : i32
    return %c0_i32, %c0_i32_0 : i32, i32
  }
  func.func @transform_3(%arg0: i32) -> (i32, i32) {
    %c0_i32 = arith.constant 0 : i32
    %c0_i32_0 = arith.constant 0 : i32
    %c0_i32_1 = arith.constant 0 : i32
    return %c0_i32, %c0_i32_0 : i32, i32
  }
  func.func @transform_4(%arg0: i32) -> (i32, i32) {
    %c0_i32 = arith.constant 0 : i32
    %c0_i32_0 = arith.constant 0 : i32
    %c0_i32_1 = arith.constant 0 : i32
    return %c0_i32, %c0_i32_0 : i32, i32
  }
  func.func @transform_5(%arg0: i32) -> (i32, i32) {
    %c0_i32 = arith.constant 0 : i32
    %c0_i32_0 = arith.constant 0 : i32
    return %arg0, %c0_i32 : i32, i32
  }
}

</mosaic_0001>

<llo_original>
// kernel: tpu_custom_call.1
$region0: #{tpu_custom_call.1}
  #allocation0 [shape = 'u32[]', space=smem, size = 0x4, offset = 0x4, fixed_abs, tag = 'smem constant byte address 0x4 - core index']
  #allocation1 [shape = 'u32[72,128]{1,0:T(1,128)}', space=vmem, size = 0x9000, scoped, tag = 'internal scratch']
  #allocation2 [shape = 'f32[1,1]{1,0:T(1,128)S(6)}', space=smem, size = 0x200, scoped, tag = 'scoped memory for tpu_custom_call.1']
  %s0 = inlined_call_operand.vmem [shape: f32[1,128], index: 0, kind: input, shape index: {}]
  %s1 = inlined_call_operand.vmem [shape: f32[128,256], index: 1, kind: input, shape index: {}]
  %s2 = inlined_call_operand.vmem [shape: f32[1,256], index: 2, kind: input, shape index: {}]
  %s3 = inlined_call_operand.vmem [shape: f32[256,8], index: 3, kind: input, shape index: {}]
  %s4 = inlined_call_operand.<no memory space> [shape: f32[1,1], index: 4, kind: input, shape index: {}]
  %s5 = inlined_call_operand.hbm [shape: f32[1,8], index: 5, kind: output, shape index: {}]
  %s6 = sld [smem:[#allocation0]]
  $region30: #{tpu_custom_call.1} parent=0
    _
  %s8 = ssub.s32 1, %s6
  %s9 = scalar_select 0, %s8, %s6
  %10 = sst [smem:[#allocation2]] %s4
  $region1: #{tpu_custom_call.1} parent=0
    #allocation3 [shape = 'u8[512]{0}', space=vmem, size = 0x400, scoped, tag = 'output window, operand 0, single buffered']
    #allocation4 [shape = 's32[1]{0}', space=sflag, size = 0x4, scoped, tag = 'scoped memory for tpu_custom_call.1']
    %11 = vsyncpa [#allocation4], 0
    // Predicated region
    $region2: #{tpu_custom_call.1} parent=1 // pred_check
      _
    $region3: #{tpu_custom_call.1} parent=1 // pred_check_branch
      %13 = sbr.rel (0) target = $region5
    $region4: #{tpu_custom_call.1} parent=1 // pred_region
      _
    $region5: #{tpu_custom_call.1} parent=1 // pred_fallthru
      _
    // Predicated region
    $region6: #{tpu_custom_call.1} parent=1 // pred_check
      _
    $region7: #{tpu_custom_call.1} parent=1 // pred_check_branch
      %15 = sbr.rel (0) target = $region9
    $region8: #{tpu_custom_call.1} parent=1 // pred_region
      _
    $region9: #{tpu_custom_call.1} parent=1 // pred_fallthru
      _
    // Predicated region
    $region10: #{tpu_custom_call.1} parent=1 // pred_check
      _
    $region11: #{tpu_custom_call.1} parent=1 // pred_check_branch
      %17 = sbr.rel (0) target = $region13
    $region12: #{tpu_custom_call.1} parent=1 // pred_region
      _
    $region13: #{tpu_custom_call.1} parent=1 // pred_fallthru
      _
    // Predicated region
    $region14: #{tpu_custom_call.1} parent=1 // pred_check
      _
    $region15: #{tpu_custom_call.1} parent=1 // pred_check_branch
      %19 = sbr.rel (0) target = $region17
    $region16: #{tpu_custom_call.1} parent=1 // pred_region
      _
    $region17: #{tpu_custom_call.1} parent=1 // pred_fallthru
      _
    // Predicated region
    $region18: #{tpu_custom_call.1} parent=1 // pred_check
      _
    $region19: #{tpu_custom_call.1} parent=1 // pred_check_branch
      %21 = sbr.rel (0) target = $region21
    $region20: #{tpu_custom_call.1} parent=1 // pred_region
      _
    $region21: #{tpu_custom_call.1} parent=1 // pred_fallthru
      _
    %v22 = vld [vmem:[%s0] sm:$0x1]
    %v23 = vld [vmem:[%s1] sm:$0xff]
    %v24 = vld [vmem:[%s1 + $0x8] sm:$0xff]
    %v25 = vld [vmem:[%s1 + $0x10] sm:$0xff]
    %v26 = vld [vmem:[%s1 + $0x18] sm:$0xff]
    %v27 = vld [vmem:[%s1 + $0x20] sm:$0xff]
    %v28 = vld [vmem:[%s1 + $0x28] sm:$0xff]
    %v29 = vld [vmem:[%s1 + $0x30] sm:$0xff]
    %v30 = vld [vmem:[%s1 + $0x38] sm:$0xff]
    %v31 = vld [vmem:[%s1 + $0x40] sm:$0xff]
    %v32 = vld [vmem:[%s1 + $0x48] sm:$0xff]
    %v33 = vld [vmem:[%s1 + $0x50] sm:$0xff]
    %v34 = vld [vmem:[%s1 + $0x58] sm:$0xff]
    %v35 = vld [vmem:[%s1 + $0x60] sm:$0xff]
    %v36 = vld [vmem:[%s1 + $0x68] sm:$0xff]
    %v37 = vld [vmem:[%s1 + $0x70] sm:$0xff]
    %v38 = vld [vmem:[%s1 + $0x78] sm:$0xff]
    %v39 = vld [vmem:[%s1 + $0x80] sm:$0xff]
    %v40 = vld [vmem:[%s1 + $0x88] sm:$0xff]
    %v41 = vld [vmem:[%s1 + $0x90] sm:$0xff]
    %v42 = vld [vmem:[%s1 + $0x98] sm:$0xff]
    %v43 = vld [vmem:[%s1 + $0xa0] sm:$0xff]
    %v44 = vld [vmem:[%s1 + $0xa8] sm:$0xff]
    %v45 = vld [vmem:[%s1 + $0xb0] sm:$0xff]
    %v46 = vld [vmem:[%s1 + $0xb8] sm:$0xff]
    %v47 = vld [vmem:[%s1 + $0xc0] sm:$0xff]
    %v48 = vld [vmem:[%s1 + $0xc8] sm:$0xff]
    %v49 = vld [vmem:[%s1 + $0xd0] sm:$0xff]
    %v50 = vld [vmem:[%s1 + $0xd8] sm:$0xff]
    %v51 = vld [vmem:[%s1 + $0xe0] sm:$0xff]
    %v52 = vld [vmem:[%s1 + $0xe8] sm:$0xff]
    %v53 = vld [vmem:[%s1 + $0xf0] sm:$0xff]
    %v54 = vld [vmem:[%s1 + $0xf8] sm:$0xff]
    %v55 = vld [vmem:[%s2] sm:$0x3]
    %v57 = vperm.slane %v55, 0
    %v58 = vperm.slane %v55, 1
    %61 = vmatpush.msra.mxu0 %v53
    %62 = vmatpush.msra.mxu0 %v51
    %63 = vmatpush.msra.mxu0 %v49
    %64 = vmatpush.msra.mxu0 %v47
    %65 = vmatpush.msra.mxu0 %v45
    %66 = vmatpush.msra.mxu0 %v43
    %67 = vmatpush.msra.mxu0 %v41
    %68 = vmatpush.msra.mxu0 %v39
    %69 = vmatpush.msra.mxu0 %v37
    %70 = vmatpush.msra.mxu0 %v35
    %71 = vmatpush.msra.mxu0 %v33
    %72 = vmatpush.msra.mxu0 %v31
    %73 = vmatpush.msra.mxu0 %v29
    %74 = vmatpush.msra.mxu0 %v27
    %75 = vmatpush.msra.mxu0 %v25
    %76 = vmatpush.msra.mxu0 %v23
    %77 = vmatmul.f32.gmra.mxu0 %v22
    %v78 = vpop.f32.mrf.mxu0
    %v79 = vadd.f32 %v57, %v78
    %80 = vdwg.mxu0
    %81 = vmatpush.msra.mxu0 %v54
    %82 = vmatpush.msra.mxu0 %v52
    %83 = vmatpush.msra.mxu0 %v50
    %84 = vmatpush.msra.mxu0 %v48
    %85 = vmatpush.msra.mxu0 %v46
    %86 = vmatpush.msra.mxu0 %v44
    %87 = vmatpush.msra.mxu0 %v42
    %88 = vmatpush.msra.mxu0 %v40
    %89 = vmatpush.msra.mxu0 %v38
    %90 = vmatpush.msra.mxu0 %v36
    %91 = vmatpush.msra.mxu0 %v34
    %92 = vmatpush.msra.mxu0 %v32
    %93 = vmatpush.msra.mxu0 %v30
    %94 = vmatpush.msra.mxu0 %v28
    %95 = vmatpush.msra.mxu0 %v26
    %96 = vmatpush.msra.mxu0 %v24
    %97 = vmatmul.f32.gmra.mxu0 %v22
    %v98 = vpop.f32.mrf.mxu0
    %v99 = vadd.f32 %v58, %v98
    %100 = vdwg.mxu0
    %v101 = vmul.f32 %v79, 0.5
    %v102 = vmul.f32 %v99, 0.5
    %v103 = vtanh.pop %v101
    %v104 = vtanh.pop %v102
    %v105 = vmul.f32 %v103, 0.5
    %v106 = vmul.f32 %v104, 0.5
    %v107 = vadd.f32 %v105, 0.5
    %v108 = vadd.f32 %v106, 0.5
    %v109 = vld [vmem:[%s3] sm:$0xff]
    %v110 = vld [vmem:[%s3 + $0x8] sm:$0xff]
    %v111 = vld [vmem:[%s3 + $0x10] sm:$0xff]
    %v112 = vld [vmem:[%s3 + $0x18] sm:$0xff]
    %v113 = vld [vmem:[%s3 + $0x20] sm:$0xff]
    %v114 = vld [vmem:[%s3 + $0x28] sm:$0xff]
    %v115 = vld [vmem:[%s3 + $0x30] sm:$0xff]
    %v116 = vld [vmem:[%s3 + $0x38] sm:$0xff]
    %v117 = vld [vmem:[%s3 + $0x40] sm:$0xff]
    %v118 = vld [vmem:[%s3 + $0x48] sm:$0xff]
    %v119 = vld [vmem:[%s3 + $0x50] sm:$0xff]
    %v120 = vld [vmem:[%s3 + $0x58] sm:$0xff]
    %v121 = vld [vmem:[%s3 + $0x60] sm:$0xff]
    %v122 = vld [vmem:[%s3 + $0x68] sm:$0xff]
    %v123 = vld [vmem:[%s3 + $0x70] sm:$0xff]
    %v124 = vld [vmem:[%s3 + $0x78] sm:$0xff]
    %v125 = vld [vmem:[%s3 + $0x80] sm:$0xff]
    %v126 = vld [vmem:[%s3 + $0x88] sm:$0xff]
    %v127 = vld [vmem:[%s3 + $0x90] sm:$0xff]
    %v128 = vld [vmem:[%s3 + $0x98] sm:$0xff]
    %v129 = vld [vmem:[%s3 + $0xa0] sm:$0xff]
    %v130 = vld [vmem:[%s3 + $0xa8] sm:$0xff]
    %v131 = vld [vmem:[%s3 + $0xb0] sm:$0xff]
    %v132 = vld [vmem:[%s3 + $0xb8] sm:$0xff]
    %v133 = vld [vmem:[%s3 + $0xc0] sm:$0xff]
    %v134 = vld [vmem:[%s3 + $0xc8] sm:$0xff]
    %v135 = vld [vmem:[%s3 + $0xd0] sm:$0xff]
    %v136 = vld [vmem:[%s3 + $0xd8] sm:$0xff]
    %v137 = vld [vmem:[%s3 + $0xe0] sm:$0xff]
    %v138 = vld [vmem:[%s3 + $0xe8] sm:$0xff]
    %v139 = vld [vmem:[%s3 + $0xf0] sm:$0xff]
    %v140 = vld [vmem:[%s3 + $0xf8] sm:$0xff]
    %s141 = sld [smem:[#allocation2]]
    %v142 = vstv %s141
    %143 = vmatpush.msra.mxu0 %v124
    %144 = vmatpush.msra.mxu0 %v123
    %145 = vmatpush.msra.mxu0 %v122
    %146 = vmatpush.msra.mxu0 %v121
    %147 = vmatpush.msra.mxu0 %v120
    %148 = vmatpush.msra.mxu0 %v119
    %149 = vmatpush.msra.mxu0 %v118
    %150 = vmatpush.msra.mxu0 %v117
    %151 = vmatpush.msra.mxu0 %v116
    %152 = vmatpush.msra.mxu0 %v115
    %153 = vmatpush.msra.mxu0 %v114
    %154 = vmatpush.msra.mxu0 %v113
    %155 = vmatpush.msra.mxu0 %v112
    %156 = vmatpush.msra.mxu0 %v111
    %157 = vmatpush.msra.mxu0 %v110
    %158 = vmatpush.msra.mxu0 %v109
    %159 = vmatmul.f32.gmra.mxu0 %v107
    %v160 = vpop.f32.mrf.mxu0
    %v161 = vadd.f32 %v142, %v160
    %162 = vdwg.mxu0
    %163 = vmatpush.msra.mxu0 %v140
    %164 = vmatpush.msra.mxu0 %v139
    %165 = vmatpush.msra.mxu0 %v138
    %166 = vmatpush.msra.mxu0 %v137
    %167 = vmatpush.msra.mxu0 %v136
    %168 = vmatpush.msra.mxu0 %v135
    %169 = vmatpush.msra.mxu0 %v134
    %170 = vmatpush.msra.mxu0 %v133
    %171 = vmatpush.msra.mxu0 %v132
    %172 = vmatpush.msra.mxu0 %v131
    %173 = vmatpush.msra.mxu0 %v130
    %174 = vmatpush.msra.mxu0 %v129
    %175 = vmatpush.msra.mxu0 %v128
    %176 = vmatpush.msra.mxu0 %v127
    %177 = vmatpush.msra.mxu0 %v126
    %178 = vmatpush.msra.mxu0 %v125
    %179 = vmatmul.f32.gmra.mxu0 %v108
    %v180 = vpop.f32.mrf.mxu0
    %v181 = vadd.f32 %v161, %v180
    %182 = vdwg.mxu0
    %v183 = vmul.f32 %v181, 0.5
    %v184 = vtanh.pop %v183
    %v185 = vmul.f32 %v184, 0.5
    %v186 = vadd.f32 %v185, 0.5
    %vm187 = vcmask 57344
    %188 = vst.msk [vmem:[#allocation3] sm:$0x1] %vm187, %v186
    // Predicated region
    $region22: #{tpu_custom_call.1} parent=1 // pred_check
      _
    $region23: #{tpu_custom_call.1} parent=1 // pred_check_branch
      %190 = sbr.rel (0) target = $region25
    $region24: #{tpu_custom_call.1} parent=1 // pred_region
      %192 = vsyncadd [#allocation4], 0
      %s194 = sshll.u32 [#allocation3], 4
      %s195 = int_to_ptr.vmem [resolvable:$true] %s194
      %s196 = sshll.u32 %s5, 4
      %s197 = int_to_ptr.hbm [resolvable:$true] %s196
      %199 = dma.vmem_to_hbm [thread:$0]  %s195, 16, %s197, [#allocation4]
    $region25: #{tpu_custom_call.1} parent=1 // pred_fallthru
      _
    // Predicated region
    $region26: #{tpu_custom_call.1} parent=1 // pred_check
      _
    $region27: #{tpu_custom_call.1} parent=1 // pred_check_branch
      %201 = sbr.rel (0) target = $region29
    $region28: #{tpu_custom_call.1} parent=1 // pred_region
      %203 = dma.done [#allocation4], 16
    $region29: #{tpu_custom_call.1} parent=1 // pred_fallthru
      _
    %204 = vsyncpa [#allocation4], 1

</llo_original>
